<compile_context>
chip_gen: v7x
topology: tpu7x:2x2x1
jax: 0.10.0
libtpu: 0.0.40
codegen_flags: <defaults>
</compile_context>

<pallas_src>
import functools

import jax
import jax.numpy as jnp
from jax import lax
from jax.experimental import pallas as pl
from jax.experimental.pallas import tpu as pltpu


def _round_up(n, m):
    return ((n + m - 1) // m) * m


# --------------------------- fused forward kernel ---------------------------

def _fused_fe_kernel(x_ref, *rest, n_enc, n_dec, n_valid_rows, feat_in,
                     needs_mask):
    """One grid step = one (TM, F) row tile.

    Runs the full encoder+decoder chain with activations kept in vregs/VMEM,
    writes [x | feature] into the output tile, and emits this tile's (masked)
    partial sum of (x_rec - x)^2 into an SMEM scalar output.
    """
    n_layers = n_enc + n_dec
    wb_refs = rest[: 2 * n_layers]          # w0, b0, w1, b1, ...
    out_ref = rest[2 * n_layers]            # (TM, F + dim_o)
    mse_ref = rest[2 * n_layers + 1]        # (1, 1) SMEM

    x = x_ref[...].astype(jnp.float32)      # (TM, F)

    # TODO(synk): cast matmul inputs to bf16 (keep f32 accumulation) once the
    # model is scaled up (v6e/v7x MXU); f32 kept here for the tiny layer widths.
    h = x
    feature = None
    for li in range(n_layers):
        w = wb_refs[2 * li][...]            # (fin, fout), VMEM-resident
        b = wb_refs[2 * li + 1][...]        # (1, fout) -> broadcasts over rows
        y = jnp.dot(h, w, preferred_element_type=jnp.float32) + b
        last_enc = li == n_enc - 1
        last_dec = li == n_layers - 1
        if not (last_enc or last_dec):
            y = jnp.maximum(y, 0.01 * y)    # LeakyReLU(0.01): single vmax
        h = y
        if last_enc:
            feature = h                     # (TM, dim_o)
    x_rec = h                               # (TM, F)

    # Partial MSE sum for this tile (padded rows contribute 0).
    d = x_rec - x
    if needs_mask:
        tm = x_ref.shape[0]
        row0 = pl.program_id(0) * tm
        rows = row0 + lax.broadcasted_iota(jnp.int32, (tm, 1), 0)
        valid = (rows < n_valid_rows).astype(jnp.float32)
        d = d * valid
    mse_ref[0, 0] = jnp.sum(d * d)

    # new_input tile = concat([x, feature], axis=-1), written in place (no
    # separate concatenate pass over HBM).
    out_ref[:, :feat_in] = x.astype(out_ref.dtype)
    out_ref[:, feat_in:] = feature.astype(out_ref.dtype)


# ------------------------------ model wrapper ------------------------------

def init_params(key, input_size, dim_h, num_l, dim_o, coef):
    """Replicates AE.__init__ layer sizing; deterministic uniform init."""
    h_enc = [input_size]
    dh = dim_h
    for _ in range(num_l):
        h_enc.append(dh)
        dh = int(dh * coef)
    h_enc.append(dim_o)
    h_dec = list(reversed(h_enc))

    def make_layers(key, sizes):
        ws, bs = [], []
        for k in range(len(sizes) - 1):
            fan_in, fan_out = sizes[k], sizes[k + 1]
            key, kw, kb = jax.random.split(key, 3)
            bound = 1.0 / jnp.sqrt(fan_in)
            # stored (in, out): transpose of PyTorch's (out, in)
            ws.append(jax.random.uniform(kw, (fan_in, fan_out), jnp.float32,
                                         -bound, bound))
            bs.append(jax.random.uniform(kb, (1, fan_out), jnp.float32,
                                         -bound, bound))
        return key, ws, bs

    key, enc_ws, enc_bs = make_layers(key, h_enc)
    key, dec_ws, dec_bs = make_layers(key, h_dec)
    return (enc_ws, enc_bs, dec_ws, dec_bs)


def fe_model_forward(x, params, reg_weight, *, tile_m=2048):
    """Returns (new_input, loss) -- mirrors FEModel.forward (inference)."""
    # TODO(synk): training-mode stochastic noise (CoupledGaussianDropout,
    # FeatureReversalNoise, Dropout) intentionally omitted (identity in eval).
    enc_ws, enc_bs, dec_ws, dec_bs = params
    ws = list(enc_ws) + list(dec_ws)
    bs = list(enc_bs) + list(dec_bs)
    n_enc, n_dec = len(enc_ws), len(dec_ws)

    B, S, F = x.shape
    dim_o = enc_ws[-1].shape[1]
    N = B * S

    # Row tile: <=2048 rows (2048*36*4 B ~ 288 KiB per out tile; with 2x
    # double-buffering this is far under the 32 MiB scoped VMEM on v7x).
    tm = min(tile_m, _round_up(N, 8))
    n_pad = _round_up(N, tm)
    num_tiles = n_pad // tm

    xf = x.reshape(N, F).astype(jnp.float32)
    if n_pad != N:
        xf = jnp.pad(xf, ((0, n_pad - N), (0, 0)))

    kernel = functools.partial(_fused_fe_kernel, n_enc=n_enc, n_dec=n_dec,
                               n_valid_rows=N, feat_in=F,
                               needs_mask=(n_pad != N))

    wb_args, wb_specs = [], []
    for w, b in zip(ws, bs):
        wb_args += [w, b]
        # Full-array blocks, constant index_map -> weights stay VMEM-resident
        # across grid steps (no re-DMA).
        wb_specs += [pl.BlockSpec(w.shape, lambda i: (0, 0)),
                     pl.BlockSpec(b.shape, lambda i: (0, 0))]

    out_padded, mse_parts = pl.pallas_call(
        kernel,
        grid=(num_tiles,),
        in_specs=[pl.BlockSpec((tm, F), lambda i: (i, 0))] + wb_specs,
        out_specs=(
            pl.BlockSpec((tm, F + dim_o), lambda i: (i, 0)),
            pl.BlockSpec((1, 1), lambda i: (i, 0),
                         memory_space=pltpu.MemorySpace.SMEM),
        ),
        out_shape=(
            jax.ShapeDtypeStruct((n_pad, F + dim_o), jnp.float32),
            jax.ShapeDtypeStruct((num_tiles, 1), jnp.float32),
        ),
        compiler_params=pltpu.CompilerParams(
            dimension_semantics=("parallel",),
            vmem_limit_bytes=32 * 1024 * 1024,
        ),
    )(xf, *wb_args)

    if n_pad != N:
        out_padded = out_padded[:N]
    new_input = out_padded.reshape(B, S, F + dim_o)

    # pred loss: nn.MSELoss (mean reduction) over all elements.
    loss = jnp.sum(mse_parts) / jnp.float32(N * F)
    # l2 regularization: torch.norm(W, 2) == Frobenius norm. Tiny weights ->
    # plain JAX (XLA fuses it); no scalar-only kernel launches.
    reg = jnp.float32(0.0)
    for w in ws:
        reg = reg + jnp.sqrt(jnp.sum(w.astype(jnp.float32) ** 2))
    loss = loss + reg_weight * reg
    return new_input, loss


# -------------------------- pure-JAX reference -----------------------------

def _reference_forward(x, params, reg_weight):
    enc_ws, enc_bs, dec_ws, dec_bs = params
    B, S, F = x.shape
    h = x.reshape(B * S, F)
    for i, (w, b) in enumerate(zip(enc_ws, enc_bs)):
        h = h @ w + b
        if i < len(enc_ws) - 1:
            h = jnp.where(h > 0, h, 0.01 * h)
    feature = h
    for i, (w, b) in enumerate(zip(dec_ws, dec_bs)):
        h = h @ w + b
        if i < len(dec_ws) - 1:
            h = jnp.where(h > 0, h, 0.01 * h)
    x_rec = h
    loss = jnp.mean((x_rec - x.reshape(B * S, F)) ** 2)
    for w in list(enc_ws) + list(dec_ws):
        loss = loss + reg_weight * jnp.sqrt(jnp.sum(w ** 2))
    new_input = jnp.concatenate([x, feature.reshape(B, S, -1)], axis=2)
    return new_input, loss


# ---------------------------------- main -----------------------------------

if __name__ == "__main__":
    # Small synthetic config (stand-in for CfgNode):
    #   FE.DIM_HIDDEN=16, FE.NUM_HIDDEN=2, FE.DIM_OUT=4, FE.DIM_HIDDEN_FACT=0.5
    #   FE.PRED_LOSS='mse', FE.REG_TYPE='l2', FE.REG_WEIGHT=1e-4
    #   MDA.APPLY with FEATURE_NUM=32 -> input_size=32
    INPUT_SIZE, DIM_H, NUM_L, DIM_O, COEF = 32, 16, 2, 4, 0.5
    REG_WEIGHT = 1e-4

    key = jax.random.PRNGKey(0)
    key, kx = jax.random.split(key)
    params = init_params(key, INPUT_SIZE, DIM_H, NUM_L, DIM_O, COEF)

    B, S = 2, 8
    x = jax.random.normal(kx, (B, S, INPUT_SIZE), jnp.float32)

    fwd = jax.jit(functools.partial(fe_model_forward, reg_weight=REG_WEIGHT))
    new_input, loss = fwd(x, params)
    jax.block_until_ready((new_input, loss))

    assert new_input.shape == (B, S, INPUT_SIZE + DIM_O)
    assert loss.shape == ()

    # Correctness check against a plain-JAX reference.
    ref_new_input, ref_loss = _reference_forward(x, params, REG_WEIGHT)
    assert jnp.allclose(new_input, ref_new_input, rtol=1e-3, atol=1e-3), \
        "new_input mismatch vs reference"
    assert jnp.allclose(loss, ref_loss, rtol=1e-3, atol=1e-3), \
        "loss mismatch vs reference"

    print("KERNEL_OK")
</pallas_src>

<mosaic_0001>
module attributes {stable_mosaic.version = 11 : i64} {
  func.func @_fused_fe_kernel(%arg0: i32, %arg1: memref<16x32xf32, #tpu.memory_space<vmem>>, %arg2: memref<32x16xf32, #tpu.memory_space<vmem>>, %arg3: memref<1x16xf32, #tpu.memory_space<vmem>>, %arg4: memref<16x8xf32, #tpu.memory_space<vmem>>, %arg5: memref<1x8xf32, #tpu.memory_space<vmem>>, %arg6: memref<8x4xf32, #tpu.memory_space<vmem>>, %arg7: memref<1x4xf32, #tpu.memory_space<vmem>>, %arg8: memref<4x8xf32, #tpu.memory_space<vmem>>, %arg9: memref<1x8xf32, #tpu.memory_space<vmem>>, %arg10: memref<8x16xf32, #tpu.memory_space<vmem>>, %arg11: memref<1x16xf32, #tpu.memory_space<vmem>>, %arg12: memref<16x32xf32, #tpu.memory_space<vmem>>, %arg13: memref<1x32xf32, #tpu.memory_space<vmem>>, %arg14: memref<16x36xf32, #tpu.memory_space<vmem>>, %arg15: memref<1x1xf32, #tpu.memory_space<smem>>) attributes {dimension_semantics = [#tpu.dimension_semantics<parallel>], iteration_bounds = array<i64: 1>, scalar_prefetch = 0 : i64, scratch_operands = 0 : i64, tpu.core_type = #tpu.core_type<tc>, window_params = [{transform_indices = @transform_0, window_bounds = array<i64: 16, 32>}, {pipeline_mode = #tpu.pipeline_mode<synchronous>, transform_indices = @transform_1, window_bounds = array<i64: 32, 16>}, {pipeline_mode = #tpu.pipeline_mode<synchronous>, transform_indices = @transform_2, window_bounds = array<i64: 1, 16>}, {pipeline_mode = #tpu.pipeline_mode<synchronous>, transform_indices = @transform_3, window_bounds = array<i64: 16, 8>}, {pipeline_mode = #tpu.pipeline_mode<synchronous>, transform_indices = @transform_4, window_bounds = array<i64: 1, 8>}, {pipeline_mode = #tpu.pipeline_mode<synchronous>, transform_indices = @transform_5, window_bounds = array<i64: 8, 4>}, {pipeline_mode = #tpu.pipeline_mode<synchronous>, transform_indices = @transform_6, window_bounds = array<i64: 1, 4>}, {pipeline_mode = #tpu.pipeline_mode<synchronous>, transform_indices = @transform_7, window_bounds = array<i64: 4, 8>}, {pipeline_mode = #tpu.pipeline_mode<synchronous>, transform_indices = @transform_8, window_bounds = array<i64: 1, 8>}, {pipeline_mode = #tpu.pipeline_mode<synchronous>, transform_indices = @transform_9, window_bounds = array<i64: 8, 16>}, {pipeline_mode = #tpu.pipeline_mode<synchronous>, transform_indices = @transform_10, window_bounds = array<i64: 1, 16>}, {pipeline_mode = #tpu.pipeline_mode<synchronous>, transform_indices = @transform_11, window_bounds = array<i64: 16, 32>}, {pipeline_mode = #tpu.pipeline_mode<synchronous>, transform_indices = @transform_12, window_bounds = array<i64: 1, 32>}, {transform_indices = @transform_13, window_bounds = array<i64: 16, 36>}, {transform_indices = @transform_14, window_bounds = array<i64: 1, 1>}]} {
    %c0 = arith.constant 0 : index
    %c0_0 = arith.constant 0 : index
    %0 = vector.load %arg1[%c0, %c0_0] : memref<16x32xf32, #tpu.memory_space<vmem>>, vector<16x32xf32>
    %c0_1 = arith.constant 0 : index
    %c0_2 = arith.constant 0 : index
    %1 = vector.load %arg2[%c0_1, %c0_2] : memref<32x16xf32, #tpu.memory_space<vmem>>, vector<32x16xf32>
    %c0_3 = arith.constant 0 : index
    %c0_4 = arith.constant 0 : index
    %2 = vector.load %arg3[%c0_3, %c0_4] : memref<1x16xf32, #tpu.memory_space<vmem>>, vector<1x16xf32>
    %cst = arith.constant dense<0.000000e+00> : vector<16x16xf32>
    %3 = tpu.matmul %0, %1, %cst {dimension_numbers = #tpu.dot_dimension_numbers<[1], [0], [0], [1], [0, 0, 1, 1], [], []>} : vector<16x32xf32>, vector<32x16xf32>, vector<16x16xf32> -> vector<16x16xf32>
    %4 = vector.broadcast %2 : vector<1x16xf32> to vector<16x16xf32>
    %5 = arith.addf %3, %4 : vector<16x16xf32>
    %cst_5 = arith.constant 0.00999999977 : f32
    %6 = vector.broadcast %cst_5 : f32 to vector<16x16xf32>
    %7 = arith.mulf %6, %5 : vector<16x16xf32>
    %8 = arith.maximumf %5, %7 : vector<16x16xf32>
    %c0_6 = arith.constant 0 : index
    %c0_7 = arith.constant 0 : index
    %9 = vector.load %arg4[%c0_6, %c0_7] : memref<16x8xf32, #tpu.memory_space<vmem>>, vector<16x8xf32>
    %c0_8 = arith.constant 0 : index
    %c0_9 = arith.constant 0 : index
    %10 = vector.load %arg5[%c0_8, %c0_9] : memref<1x8xf32, #tpu.memory_space<vmem>>, vector<1x8xf32>
    %cst_10 = arith.constant dense<0.000000e+00> : vector<16x8xf32>
    %11 = tpu.matmul %8, %9, %cst_10 {dimension_numbers = #tpu.dot_dimension_numbers<[1], [0], [0], [1], [0, 0, 1, 1], [], []>} : vector<16x16xf32>, vector<16x8xf32>, vector<16x8xf32> -> vector<16x8xf32>
    %12 = vector.broadcast %10 : vector<1x8xf32> to vector<16x8xf32>
    %13 = arith.addf %11, %12 : vector<16x8xf32>
    %cst_11 = arith.constant 0.00999999977 : f32
    %14 = vector.broadcast %cst_11 : f32 to vector<16x8xf32>
    %15 = arith.mulf %14, %13 : vector<16x8xf32>
    %16 = arith.maximumf %13, %15 : vector<16x8xf32>
    %c0_12 = arith.constant 0 : index
    %c0_13 = arith.constant 0 : index
    %17 = vector.load %arg6[%c0_12, %c0_13] : memref<8x4xf32, #tpu.memory_space<vmem>>, vector<8x4xf32>
    %c0_14 = arith.constant 0 : index
    %c0_15 = arith.constant 0 : index
    %18 = vector.load %arg7[%c0_14, %c0_15] : memref<1x4xf32, #tpu.memory_space<vmem>>, vector<1x4xf32>
    %cst_16 = arith.constant dense<0.000000e+00> : vector<16x4xf32>
    %19 = tpu.matmul %16, %17, %cst_16 {dimension_numbers = #tpu.dot_dimension_numbers<[1], [0], [0], [1], [0, 0, 1, 1], [], []>} : vector<16x8xf32>, vector<8x4xf32>, vector<16x4xf32> -> vector<16x4xf32>
    %20 = vector.broadcast %18 : vector<1x4xf32> to vector<16x4xf32>
    %21 = arith.addf %19, %20 : vector<16x4xf32>
    %c0_17 = arith.constant 0 : index
    %c0_18 = arith.constant 0 : index
    %22 = vector.load %arg8[%c0_17, %c0_18] : memref<4x8xf32, #tpu.memory_space<vmem>>, vector<4x8xf32>
    %c0_19 = arith.constant 0 : index
    %c0_20 = arith.constant 0 : index
    %23 = vector.load %arg9[%c0_19, %c0_20] : memref<1x8xf32, #tpu.memory_space<vmem>>, vector<1x8xf32>
    %cst_21 = arith.constant dense<0.000000e+00> : vector<16x8xf32>
    %24 = tpu.matmul %21, %22, %cst_21 {dimension_numbers = #tpu.dot_dimension_numbers<[1], [0], [0], [1], [0, 0, 1, 1], [], []>} : vector<16x4xf32>, vector<4x8xf32>, vector<16x8xf32> -> vector<16x8xf32>
    %25 = vector.broadcast %23 : vector<1x8xf32> to vector<16x8xf32>
    %26 = arith.addf %24, %25 : vector<16x8xf32>
    %cst_22 = arith.constant 0.00999999977 : f32
    %27 = vector.broadcast %cst_22 : f32 to vector<16x8xf32>
    %28 = arith.mulf %27, %26 : vector<16x8xf32>
    %29 = arith.maximumf %26, %28 : vector<16x8xf32>
    %c0_23 = arith.constant 0 : index
    %c0_24 = arith.constant 0 : index
    %30 = vector.load %arg10[%c0_23, %c0_24] : memref<8x16xf32, #tpu.memory_space<vmem>>, vector<8x16xf32>
    %c0_25 = arith.constant 0 : index
    %c0_26 = arith.constant 0 : index
    %31 = vector.load %arg11[%c0_25, %c0_26] : memref<1x16xf32, #tpu.memory_space<vmem>>, vector<1x16xf32>
    %cst_27 = arith.constant dense<0.000000e+00> : vector<16x16xf32>
    %32 = tpu.matmul %29, %30, %cst_27 {dimension_numbers = #tpu.dot_dimension_numbers<[1], [0], [0], [1], [0, 0, 1, 1], [], []>} : vector<16x8xf32>, vector<8x16xf32>, vector<16x16xf32> -> vector<16x16xf32>
    %33 = vector.broadcast %31 : vector<1x16xf32> to vector<16x16xf32>
    %34 = arith.addf %32, %33 : vector<16x16xf32>
    %cst_28 = arith.constant 0.00999999977 : f32
    %35 = vector.broadcast %cst_28 : f32 to vector<16x16xf32>
    %36 = arith.mulf %35, %34 : vector<16x16xf32>
    %37 = arith.maximumf %34, %36 : vector<16x16xf32>
    %c0_29 = arith.constant 0 : index
    %c0_30 = arith.constant 0 : index
    %38 = vector.load %arg12[%c0_29, %c0_30] : memref<16x32xf32, #tpu.memory_space<vmem>>, vector<16x32xf32>
    %c0_31 = arith.constant 0 : index
    %c0_32 = arith.constant 0 : index
    %39 = vector.load %arg13[%c0_31, %c0_32] : memref<1x32xf32, #tpu.memory_space<vmem>>, vector<1x32xf32>
    %cst_33 = arith.constant dense<0.000000e+00> : vector<16x32xf32>
    %40 = tpu.matmul %37, %38, %cst_33 {dimension_numbers = #tpu.dot_dimension_numbers<[1], [0], [0], [1], [0, 0, 1, 1], [], []>} : vector<16x16xf32>, vector<16x32xf32>, vector<16x32xf32> -> vector<16x32xf32>
    %41 = vector.broadcast %39 : vector<1x32xf32> to vector<16x32xf32>
    %42 = arith.addf %40, %41 : vector<16x32xf32>
    %43 = arith.subf %42, %0 : vector<16x32xf32>
    %44 = arith.mulf %43, %43 : vector<16x32xf32>
    %45 = vector.shape_cast %44 : vector<16x32xf32> to vector<1x16x32xf32>
    %cst_34 = arith.constant dense<0.000000e+00> : vector<1xf32>
    %46 = vector.multi_reduction <add>, %45, %cst_34 [1, 2] : vector<1x16x32xf32> to vector<1xf32>
    %47 = vector.shape_cast %46 : vector<1xf32> to vector<1x1x1xf32>
    %48 = vector.extract %47[0, 0, 0] : f32 from vector<1x1x1xf32>
    %c0_35 = arith.constant 0 : index
    %c0_36 = arith.constant 0 : index
    %49 = memref.load %arg15[%c0_35, %c0_36] : memref<1x1xf32, #tpu.memory_space<smem>>
    memref.store %48, %arg15[%c0_35, %c0_36] : memref<1x1xf32, #tpu.memory_space<smem>>
    %c0_37 = arith.constant 0 : index
    %c0_38 = arith.constant 0 : index
    %50 = vector.load %arg14[%c0_37, %c0_38] : memref<16x36xf32, #tpu.memory_space<vmem>>, vector<16x32xf32>
    tpu.vector_store %arg14[%c0_37, %c0_38], %0 {strides = array<i32>} : memref<16x36xf32, #tpu.memory_space<vmem>>, vector<16x32xf32>,
    %c0_39 = arith.constant 0 : index
    %c32 = arith.constant 32 : index
    %51 = vector.load %arg14[%c0_39, %c32] : memref<16x36xf32, #tpu.memory_space<vmem>>, vector<16x4xf32>
    tpu.vector_store %arg14[%c0_39, %c32], %21 {strides = array<i32>} : memref<16x36xf32, #tpu.memory_space<vmem>>, vector<16x4xf32>,
    return
  }
  func.func @transform_0(%arg0: i32) -> (i32, i32) {
    %c0_i32 = arith.constant 0 : i32
    %c0_i32_0 = arith.constant 0 : i32
    return %arg0, %c0_i32 : i32, i32
  }
  func.func @transform_1(%arg0: i32) -> (i32, i32) {
    %c0_i32 = arith.constant 0 : i32
    %c0_i32_0 = arith.constant 0 : i32
    %c0_i32_1 = arith.constant 0 : i32
    return %c0_i32, %c0_i32_0 : i32, i32
  }
  func.func @transform_2(%arg0: i32) -> (i32, i32) {
    %c0_i32 = arith.constant 0 : i32
    %c0_i32_0 = arith.constant 0 : i32
    %c0_i32_1 = arith.constant 0 : i32
    return %c0_i32, %c0_i32_0 : i32, i32
  }
  func.func @transform_3(%arg0: i32) -> (i32, i32) {
    %c0_i32 = arith.constant 0 : i32
    %c0_i32_0 = arith.constant 0 : i32
    %c0_i32_1 = arith.constant 0 : i32
    return %c0_i32, %c0_i32_0 : i32, i32
  }
  func.func @transform_4(%arg0: i32) -> (i32, i32) {
    %c0_i32 = arith.constant 0 : i32
    %c0_i32_0 = arith.constant 0 : i32
    %c0_i32_1 = arith.constant 0 : i32
    return %c0_i32, %c0_i32_0 : i32, i32
  }
  func.func @transform_5(%arg0: i32) -> (i32, i32) {
    %c0_i32 = arith.constant 0 : i32
    %c0_i32_0 = arith.constant 0 : i32
    %c0_i32_1 = arith.constant 0 : i32
    return %c0_i32, %c0_i32_0 : i32, i32
  }
  func.func @transform_6(%arg0: i32) -> (i32, i32) {
    %c0_i32 = arith.constant 0 : i32
    %c0_i32_0 = arith.constant 0 : i32
    %c0_i32_1 = arith.constant 0 : i32
    return %c0_i32, %c0_i32_0 : i32, i32
  }
  func.func @transform_7(%arg0: i32) -> (i32, i32) {
    %c0_i32 = arith.constant 0 : i32
    %c0_i32_0 = arith.constant 0 : i32
    %c0_i32_1 = arith.constant 0 : i32
    return %c0_i32, %c0_i32_0 : i32, i32
  }
  func.func @transform_8(%arg0: i32) -> (i32, i32) {
    %c0_i32 = arith.constant 0 : i32
    %c0_i32_0 = arith.constant 0 : i32
    %c0_i32_1 = arith.constant 0 : i32
    return %c0_i32, %c0_i32_0 : i32, i32
  }
  func.func @transform_9(%arg0: i32) -> (i32, i32) {
    %c0_i32 = arith.constant 0 : i32
    %c0_i32_0 = arith.constant 0 : i32
    %c0_i32_1 = arith.constant 0 : i32
    return %c0_i32, %c0_i32_0 : i32, i32
  }
  func.func @transform_10(%arg0: i32) -> (i32, i32) {
    %c0_i32 = arith.constant 0 : i32
    %c0_i32_0 = arith.constant 0 : i32
    %c0_i32_1 = arith.constant 0 : i32
    return %c0_i32, %c0_i32_0 : i32, i32
  }
  func.func @transform_11(%arg0: i32) -> (i32, i32) {
    %c0_i32 = arith.constant 0 : i32
    %c0_i32_0 = arith.constant 0 : i32
    %c0_i32_1 = arith.constant 0 : i32
    return %c0_i32, %c0_i32_0 : i32, i32
  }
  func.func @transform_12(%arg0: i32) -> (i32, i32) {
    %c0_i32 = arith.constant 0 : i32
    %c0_i32_0 = arith.constant 0 : i32
    %c0_i32_1 = arith.constant 0 : i32
    return %c0_i32, %c0_i32_0 : i32, i32
  }
  func.func @transform_13(%arg0: i32) -> (i32, i32) {
    %c0_i32 = arith.constant 0 : i32
    %c0_i32_0 = arith.constant 0 : i32
    return %arg0, %c0_i32 : i32, i32
  }
  func.func @transform_14(%arg0: i32) -> (i32, i32) {
    %c0_i32 = arith.constant 0 : i32
    %c0_i32_0 = arith.constant 0 : i32
    return %arg0, %c0_i32 : i32, i32
  }
}

</mosaic_0001>

<llo_original>
// kernel: fe_model_forward.1
$region0: #{fe_model_forward.1}
  #allocation0 [shape = 'u32[]', space=smem, size = 0x4, offset = 0x4, fixed_abs, tag = 'smem constant byte address 0x4 - core index']
  #allocation1 [shape = 'u32[144,128]{1,0:T(1,128)}', space=vmem, size = 0x12000, scoped, tag = 'internal scratch']
  %s0 = inlined_call_operand.vmem [shape: f32[16,32], index: 0, kind: input, shape index: {}]
  %s1 = inlined_call_operand.vmem [shape: f32[32,16], index: 1, kind: input, shape index: {}]
  %s2 = inlined_call_operand.vmem [shape: f32[1,16], index: 2, kind: input, shape index: {}]
  %s3 = inlined_call_operand.vmem [shape: f32[16,8], index: 3, kind: input, shape index: {}]
  %s4 = inlined_call_operand.vmem [shape: f32[1,8], index: 4, kind: input, shape index: {}]
  %s5 = inlined_call_operand.vmem [shape: f32[8,4], index: 5, kind: input, shape index: {}]
  %s6 = inlined_call_operand.vmem [shape: f32[1,4], index: 6, kind: input, shape index: {}]
  %s7 = inlined_call_operand.vmem [shape: f32[4,8], index: 7, kind: input, shape index: {}]
  %s8 = inlined_call_operand.vmem [shape: f32[1,8], index: 8, kind: input, shape index: {}]
  %s9 = inlined_call_operand.vmem [shape: f32[8,16], index: 9, kind: input, shape index: {}]
  %s10 = inlined_call_operand.vmem [shape: f32[1,16], index: 10, kind: input, shape index: {}]
  %s11 = inlined_call_operand.vmem [shape: f32[16,32], index: 11, kind: input, shape index: {}]
  %s12 = inlined_call_operand.vmem [shape: f32[1,32], index: 12, kind: input, shape index: {}]
  %s13 = inlined_call_operand.hbm [shape: f32[16,36], index: 13, kind: output, shape index: {0}]
  %s14 = inlined_call_operand.hbm [shape: f32[1,1], index: 14, kind: output, shape index: {1}]
  %15 = xla_tuple %s13, %s14
  %s16 = sld [smem:[#allocation0]]
  $region70: #{fe_model_forward.1} parent=0
    _
  %s18 = ssub.s32 1, %s16
  %s19 = scalar_select 0, %s18, %s16
  $region1: #{fe_model_forward.1} parent=0
    #allocation2 [shape = 'u8[8192]{0}', space=vmem, size = 0x2000, scoped, tag = 'output window, operand 0, single buffered']
    #allocation3 [shape = 's32[1]{0}', space=sflag, size = 0x4, scoped, tag = 'scoped memory for fe_model_forward.1']
    #allocation4 [shape = 's32[1]{0}', space=sflag, size = 0x4, scoped, tag = 'scoped memory for fe_model_forward.1']
    #allocation5 [shape = 'u8[512]{0}', space=smem, size = 0x200, scoped, tag = 'output window, operand 1, single buffered']
    %20 = vsyncpa [#allocation3], 0
    %21 = vsyncpa [#allocation4], 0
    // Predicated region
    $region2: #{fe_model_forward.1} parent=1 // pred_check
      _
    $region3: #{fe_model_forward.1} parent=1 // pred_check_branch
      %23 = sbr.rel (0) target = $region5
    $region4: #{fe_model_forward.1} parent=1 // pred_region
      _
    $region5: #{fe_model_forward.1} parent=1 // pred_fallthru
      _
    // Predicated region
    $region6: #{fe_model_forward.1} parent=1 // pred_check
      _
    $region7: #{fe_model_forward.1} parent=1 // pred_check_branch
      %25 = sbr.rel (0) target = $region9
    $region8: #{fe_model_forward.1} parent=1 // pred_region
      _
    $region9: #{fe_model_forward.1} parent=1 // pred_fallthru
      _
    // Predicated region
    $region10: #{fe_model_forward.1} parent=1 // pred_check
      _
    $region11: #{fe_model_forward.1} parent=1 // pred_check_branch
      %27 = sbr.rel (0) target = $region13
    $region12: #{fe_model_forward.1} parent=1 // pred_region
      _
    $region13: #{fe_model_forward.1} parent=1 // pred_fallthru
      _
    // Predicated region
    $region14: #{fe_model_forward.1} parent=1 // pred_check
      _
    $region15: #{fe_model_forward.1} parent=1 // pred_check_branch
      %29 = sbr.rel (0) target = $region17
    $region16: #{fe_model_forward.1} parent=1 // pred_region
      _
    $region17: #{fe_model_forward.1} parent=1 // pred_fallthru
      _
    // Predicated region
    $region18: #{fe_model_forward.1} parent=1 // pred_check
      _
    $region19: #{fe_model_forward.1} parent=1 // pred_check_branch
      %31 = sbr.rel (0) target = $region21
    $region20: #{fe_model_forward.1} parent=1 // pred_region
      _
    $region21: #{fe_model_forward.1} parent=1 // pred_fallthru
      _
    // Predicated region
    $region22: #{fe_model_forward.1} parent=1 // pred_check
      _
    $region23: #{fe_model_forward.1} parent=1 // pred_check_branch
      %33 = sbr.rel (0) target = $region25
    $region24: #{fe_model_forward.1} parent=1 // pred_region
      _
    $region25: #{fe_model_forward.1} parent=1 // pred_fallthru
      _
    // Predicated region
    $region26: #{fe_model_forward.1} parent=1 // pred_check
      _
    $region27: #{fe_model_forward.1} parent=1 // pred_check_branch
      %35 = sbr.rel (0) target = $region29
    $region28: #{fe_model_forward.1} parent=1 // pred_region
      _
    $region29: #{fe_model_forward.1} parent=1 // pred_fallthru
      _
    // Predicated region
    $region30: #{fe_model_forward.1} parent=1 // pred_check
      _
    $region31: #{fe_model_forward.1} parent=1 // pred_check_branch
      %37 = sbr.rel (0) target = $region33
    $region32: #{fe_model_forward.1} parent=1 // pred_region
      _
    $region33: #{fe_model_forward.1} parent=1 // pred_fallthru
      _
    // Predicated region
    $region34: #{fe_model_forward.1} parent=1 // pred_check
      _
    $region35: #{fe_model_forward.1} parent=1 // pred_check_branch
      %39 = sbr.rel (0) target = $region37
    $region36: #{fe_model_forward.1} parent=1 // pred_region
      _
    $region37: #{fe_model_forward.1} parent=1 // pred_fallthru
      _
    // Predicated region
    $region38: #{fe_model_forward.1} parent=1 // pred_check
      _
    $region39: #{fe_model_forward.1} parent=1 // pred_check_branch
      %41 = sbr.rel (0) target = $region41
    $region40: #{fe_model_forward.1} parent=1 // pred_region
      _
    $region41: #{fe_model_forward.1} parent=1 // pred_fallthru
      _
    // Predicated region
    $region42: #{fe_model_forward.1} parent=1 // pred_check
      _
    $region43: #{fe_model_forward.1} parent=1 // pred_check_branch
      %43 = sbr.rel (0) target = $region45
    $region44: #{fe_model_forward.1} parent=1 // pred_region
      _
    $region45: #{fe_model_forward.1} parent=1 // pred_fallthru
      _
    // Predicated region
    $region46: #{fe_model_forward.1} parent=1 // pred_check
      _
    $region47: #{fe_model_forward.1} parent=1 // pred_check_branch
      %45 = sbr.rel (0) target = $region49
    $region48: #{fe_model_forward.1} parent=1 // pred_region
      _
    $region49: #{fe_model_forward.1} parent=1 // pred_fallthru
      _
    // Predicated region
    $region50: #{fe_model_forward.1} parent=1 // pred_check
      _
    $region51: #{fe_model_forward.1} parent=1 // pred_check_branch
      %47 = sbr.rel (0) target = $region53
    $region52: #{fe_model_forward.1} parent=1 // pred_region
      _
    $region53: #{fe_model_forward.1} parent=1 // pred_fallthru
      _
    %v48 = vld [vmem:[%s0] sm:$0xff]
    %v49 = vld [vmem:[%s0 + $0x8] sm:$0xff]
    %v50 = vld [vmem:[%s1] sm:$0xff]
    %v51 = vld [vmem:[%s1 + $0x8] sm:$0xff]
    %v52 = vld [vmem:[%s1 + $0x10] sm:$0xff]
    %v53 = vld [vmem:[%s1 + $0x18] sm:$0xff]
    %v54 = vld [vmem:[%s2] sm:$0x1]
    %v56 = vlaneseq
    %v57 = vshrl.u32 %v56, 7
    %v58 = vsub.s32 0, %v57
    %v59 = vrot.slane %v54, %v58
    %vm61 = vcmask 261120
    %v63 = vsel %vm61, %v48, 0
    %v66 = vsel %vm61, %v49, 0
    %68 = vmatprep.subr.mxu0 0.0
    %69 = vmatpush1.msra.mxu0 %v50
    %70 = vmatprep.subr.mxu0 0.0
    %71 = vmatpush1.msra.mxu0 %v51
    %72 = vmatprep.subr.mxu0 0.0
    %73 = vmatpush1.msra.mxu0 %v52
    %74 = vmatprep.subr.mxu0 0.0
    %75 = vmatpush1.msra.mxu0 %v53
    %76 = vmatprep.subr.mxu0 0.0
    %77 = vmatpush1.msra.mxu0 0.0
    %78 = vmatprep.subr.mxu0 0.0
    %79 = vmatpush1.msra.mxu0 0.0
    %80 = vmatprep.subr.mxu0 0.0
    %81 = vmatpush1.msra.mxu0 0.0
    %82 = vmatprep.subr.mxu0 0.0
    %83 = vmatpush1.msra.mxu0 0.0
    %84 = vmatprep.subr.mxu0 0.0
    %85 = vmatpush1.msra.mxu0 0.0
    %86 = vmatprep.subr.mxu0 0.0
    %87 = vmatpush1.msra.mxu0 0.0
    %88 = vmatprep.subr.mxu0 0.0
    %89 = vmatpush1.msra.mxu0 0.0
    %90 = vmatprep.subr.mxu0 0.0
    %91 = vmatpush1.msra.mxu0 0.0
    %92 = vmatprep.subr.mxu0 0.0
    %93 = vmatpush1.msra.mxu0 0.0
    %94 = vmatprep.subr.mxu0 0.0
    %95 = vmatpush1.msra.mxu0 0.0
    %96 = vmatprep.subr.mxu0 0.0
    %97 = vmatpush1.msra.mxu0 0.0
    %98 = vmatprep.subr.mxu0 0.0
    %99 = vmatpush1.msra.mxu0 0.0
    %100 = vmatprep.subr.mxu0 0.0
    %101 = vmatpush1.msra.mxu0 0.0
    %102 = vmatprep.subr.mxu0 0.0
    %103 = vmatpush1.msra.mxu0 0.0
    %104 = vmatprep.subr.mxu0 0.0
    %105 = vmatpush1.msra.mxu0 0.0
    %106 = vmatprep.subr.mxu0 0.0
    %107 = vmatpush1.msra.mxu0 0.0
    %108 = vmatprep.subr.mxu0 0.0
    %109 = vmatpush1.msra.mxu0 0.0
    %110 = vmatprep.subr.mxu0 0.0
    %111 = vmatpush1.msra.mxu0 0.0
    %112 = vmatprep.subr.mxu0 0.0
    %113 = vmatpush1.msra.mxu0 0.0
    %114 = vmatprep.subr.mxu0 0.0
    %115 = vmatpush1.msra.mxu0 0.0
    %116 = vmatprep.subr.mxu0 0.0
    %117 = vmatpush1.msra.mxu0 0.0
    %118 = vmatprep.subr.mxu0 0.0
    %119 = vmatpush1.msra.mxu0 0.0
    %120 = vmatprep.subr.mxu0 0.0
    %121 = vmatpush1.msra.mxu0 0.0
    %122 = vmatprep.subr.mxu0 0.0
    %123 = vmatpush1.msra.mxu0 0.0
    %124 = vmatprep.subr.mxu0 0.0
    %125 = vmatpush1.msra.mxu0 0.0
    %126 = vmatprep.subr.mxu0 0.0
    %127 = vmatpush1.msra.mxu0 0.0
    %128 = vmatprep.subr.mxu0 0.0
    %129 = vmatpush1.msra.mxu0 0.0
    %130 = vmatprep.subr.mxu0 0.0
    %131 = vmatpush1.msra.mxu0 0.0
    %132 = vmatprep.mubr.f32.mxu0 0.0
    %133 = vmatmul.mubr.f32.gmra.mrb[0].mxu0 %v63
    %v134 = vpop.f32.mrb[0].mxu0
    %v135 = vadd.f32 %v59, %v134
    %v136 = vpop.f32.mrb[0].mxu0
    %137 = vmatprep.mubr.f32.mxu0 0.0
    %138 = vmatmul.mubr.f32.gmra.mrb[0].mxu0 %v66
    %v139 = vpop.f32.mrb[0].mxu0
    %v140 = vadd.f32 %v59, %v139
    %v141 = vpop.f32.mrb[0].mxu0
    %142 = vdwg.mxu0
    %v143 = vmul.f32 %v135, 0.01
    %v144 = vmul.f32 %v140, 0.01
    %v145 = vmax.f32 %v135, %v143
    %v146 = vmax.f32 %v140, %v144
    %v147 = vld [vmem:[%s3] sm:$0xff]
    %v148 = vld [vmem:[%s3 + $0x8] sm:$0xff]
    %v149 = vld [vmem:[%s4] sm:$0x1]
    %v151 = vlaneseq
    %v152 = vshrl.u32 %v151, 7
    %v153 = vsub.s32 0, %v152
    %v154 = vrot.slane %v149, %v153
    %vm156 = vcmask 130048
    %v158 = vsel %vm156, %v145, 0
    %v161 = vsel %vm156, %v146, 0
    %163 = vmatprep.subr.mxu0 0.0
    %164 = vmatpush1.msra.mxu0 %v147
    %165 = vmatprep.subr.mxu0 0.0
    %166 = vmatpush1.msra.mxu0 %v148
    %167 = vmatprep.subr.mxu0 0.0
    %168 = vmatpush1.msra.mxu0 0.0
    %169 = vmatprep.subr.mxu0 0.0
    %170 = vmatpush1.msra.mxu0 0.0
    %171 = vmatprep.subr.mxu0 0.0
    %172 = vmatpush1.msra.mxu0 0.0
    %173 = vmatprep.subr.mxu0 0.0
    %174 = vmatpush1.msra.mxu0 0.0
    %175 = vmatprep.subr.mxu0 0.0
    %176 = vmatpush1.msra.mxu0 0.0
    %177 = vmatprep.subr.mxu0 0.0
    %178 = vmatpush1.msra.mxu0 0.0
    %179 = vmatprep.subr.mxu0 0.0
    %180 = vmatpush1.msra.mxu0 0.0
    %181 = vmatprep.subr.mxu0 0.0
    %182 = vmatpush1.msra.mxu0 0.0
    %183 = vmatprep.subr.mxu0 0.0
    %184 = vmatpush1.msra.mxu0 0.0
    %185 = vmatprep.subr.mxu0 0.0
    %186 = vmatpush1.msra.mxu0 0.0
    %187 = vmatprep.subr.mxu0 0.0
    %188 = vmatpush1.msra.mxu0 0.0
    %189 = vmatprep.subr.mxu0 0.0
    %190 = vmatpush1.msra.mxu0 0.0
    %191 = vmatprep.subr.mxu0 0.0
    %192 = vmatpush1.msra.mxu0 0.0
    %193 = vmatprep.subr.mxu0 0.0
    %194 = vmatpush1.msra.mxu0 0.0
    %195 = vmatprep.subr.mxu0 0.0
    %196 = vmatpush1.msra.mxu0 0.0
    %197 = vmatprep.subr.mxu0 0.0
    %198 = vmatpush1.msra.mxu0 0.0
    %199 = vmatprep.subr.mxu0 0.0
    %200 = vmatpush1.msra.mxu0 0.0
    %201 = vmatprep.subr.mxu0 0.0
    %202 = vmatpush1.msra.mxu0 0.0
    %203 = vmatprep.subr.mxu0 0.0
    %204 = vmatpush1.msra.mxu0 0.0
    %205 = vmatprep.subr.mxu0 0.0
    %206 = vmatpush1.msra.mxu0 0.0
    %207 = vmatprep.subr.mxu0 0.0
    %208 = vmatpush1.msra.mxu0 0.0
    %209 = vmatprep.subr.mxu0 0.0
    %210 = vmatpush1.msra.mxu0 0.0
    %211 = vmatprep.subr.mxu0 0.0
    %212 = vmatpush1.msra.mxu0 0.0
    %213 = vmatprep.subr.mxu0 0.0
    %214 = vmatpush1.msra.mxu0 0.0
    %215 = vmatprep.subr.mxu0 0.0
    %216 = vmatpush1.msra.mxu0 0.0
    %217 = vmatprep.subr.mxu0 0.0
    %218 = vmatpush1.msra.mxu0 0.0
    %219 = vmatprep.subr.mxu0 0.0
    %220 = vmatpush1.msra.mxu0 0.0
    %221 = vmatprep.subr.mxu0 0.0
    %222 = vmatpush1.msra.mxu0 0.0
    %223 = vmatprep.subr.mxu0 0.0
    %224 = vmatpush1.msra.mxu0 0.0
    %225 = vmatprep.subr.mxu0 0.0
    %226 = vmatpush1.msra.mxu0 0.0
    %227 = vmatprep.mubr.f32.mxu0 0.0
    %228 = vmatmul.mubr.f32.gmra.mrb[0].mxu0 %v158
    %v229 = vpop.f32.mrb[0].mxu0
    %v230 = vadd.f32 %v154, %v229
    %v231 = vpop.f32.mrb[0].mxu0
    %232 = vmatprep.mubr.f32.mxu0 0.0
    %233 = vmatmul.mubr.f32.gmra.mrb[0].mxu0 %v161
    %v234 = vpop.f32.mrb[0].mxu0
    %v235 = vadd.f32 %v154, %v234
    %v236 = vpop.f32.mrb[0].mxu0
    %237 = vdwg.mxu0
    %v238 = vmul.f32 %v230, 0.01
    %v239 = vmul.f32 %v235, 0.01
    %v240 = vmax.f32 %v230, %v238
    %v241 = vmax.f32 %v235, %v239
    %v242 = vld [vmem:[%s5] sm:$0xff]
    %v243 = vld [vmem:[%s6] sm:$0x1]
    %v245 = vlaneseq
    %v246 = vshrl.u32 %v245, 7
    %v247 = vsub.s32 0, %v246
    %v248 = vrot.slane %v243, %v247
    %vm250 = vcmask 64512
    %v252 = vsel %vm250, %v240, 0
    %v255 = vsel %vm250, %v241, 0
    %257 = vmatprep.subr.mxu0 0.0
    %258 = vmatpush1.msra.mxu0 %v242
    %259 = vmatprep.subr.mxu0 0.0
    %260 = vmatpush1.msra.mxu0 0.0
    %261 = vmatprep.subr.mxu0 0.0
    %262 = vmatpush1.msra.mxu0 0.0
    %263 = vmatprep.subr.mxu0 0.0
    %264 = vmatpush1.msra.mxu0 0.0
    %265 = vmatprep.subr.mxu0 0.0
    %266 = vmatpush1.msra.mxu0 0.0
    %267 = vmatprep.subr.mxu0 0.0
    %268 = vmatpush1.msra.mxu0 0.0
    %269 = vmatprep.subr.mxu0 0.0
    %270 = vmatpush1.msra.mxu0 0.0
    %271 = vmatprep.subr.mxu0 0.0
    %272 = vmatpush1.msra.mxu0 0.0
    %273 = vmatprep.subr.mxu0 0.0
    %274 = vmatpush1.msra.mxu0 0.0
    %275 = vmatprep.subr.mxu0 0.0
    %276 = vmatpush1.msra.mxu0 0.0
    %277 = vmatprep.subr.mxu0 0.0
    %278 = vmatpush1.msra.mxu0 0.0
    %279 = vmatprep.subr.mxu0 0.0
    %280 = vmatpush1.msra.mxu0 0.0
    %281 = vmatprep.subr.mxu0 0.0
    %282 = vmatpush1.msra.mxu0 0.0
    %283 = vmatprep.subr.mxu0 0.0
    %284 = vmatpush1.msra.mxu0 0.0
    %285 = vmatprep.subr.mxu0 0.0
    %286 = vmatpush1.msra.mxu0 0.0
    %287 = vmatprep.subr.mxu0 0.0
    %288 = vmatpush1.msra.mxu0 0.0
    %289 = vmatprep.subr.mxu0 0.0
    %290 = vmatpush1.msra.mxu0 0.0
    %291 = vmatprep.subr.mxu0 0.0
    %292 = vmatpush1.msra.mxu0 0.0
    %293 = vmatprep.subr.mxu0 0.0
    %294 = vmatpush1.msra.mxu0 0.0
    %295 = vmatprep.subr.mxu0 0.0
    %296 = vmatpush1.msra.mxu0 0.0
    %297 = vmatprep.subr.mxu0 0.0
    %298 = vmatpush1.msra.mxu0 0.0
    %299 = vmatprep.subr.mxu0 0.0
    %300 = vmatpush1.msra.mxu0 0.0
    %301 = vmatprep.subr.mxu0 0.0
    %302 = vmatpush1.msra.mxu0 0.0
    %303 = vmatprep.subr.mxu0 0.0
    %304 = vmatpush1.msra.mxu0 0.0
    %305 = vmatprep.subr.mxu0 0.0
    %306 = vmatpush1.msra.mxu0 0.0
    %307 = vmatprep.subr.mxu0 0.0
    %308 = vmatpush1.msra.mxu0 0.0
    %309 = vmatprep.subr.mxu0 0.0
    %310 = vmatpush1.msra.mxu0 0.0
    %311 = vmatprep.subr.mxu0 0.0
    %312 = vmatpush1.msra.mxu0 0.0
    %313 = vmatprep.subr.mxu0 0.0
    %314 = vmatpush1.msra.mxu0 0.0
    %315 = vmatprep.subr.mxu0 0.0
    %316 = vmatpush1.msra.mxu0 0.0
    %317 = vmatprep.subr.mxu0 0.0
    %318 = vmatpush1.msra.mxu0 0.0
    %319 = vmatprep.subr.mxu0 0.0
    %320 = vmatpush1.msra.mxu0 0.0
    %321 = vmatprep.mubr.f32.mxu0 0.0
    %322 = vmatmul.mubr.f32.gmra.mrb[0].mxu0 %v252
    %v323 = vpop.f32.mrb[0].mxu0
    %v324 = vadd.f32 %v248, %v323
    %v325 = vpop.f32.mrb[0].mxu0
    %326 = vmatprep.mubr.f32.mxu0 0.0
    %327 = vmatmul.mubr.f32.gmra.mrb[0].mxu0 %v255
    %v328 = vpop.f32.mrb[0].mxu0
    %v329 = vadd.f32 %v248, %v328
    %v330 = vpop.f32.mrb[0].mxu0
    %331 = vdwg.mxu0
    %v332 = vld [vmem:[%s7] sm:$0xf]
    %v333 = vld [vmem:[%s8] sm:$0x1]
    %v335 = vlaneseq
    %v336 = vshrl.u32 %v335, 7
    %v337 = vsub.s32 0, %v336
    %v338 = vrot.slane %v333, %v337
    %vm340 = vcmask 31744
    %v342 = vsel %vm340, %v324, 0
    %v345 = vsel %vm340, %v329, 0
    %vm347 = vcmask 1043456
    %v349 = vsel %vm347, %v332, 0
    %351 = vmatprep.subr.mxu0 0.0
    %352 = vmatpush1.msra.mxu0 %v349
    %353 = vmatprep.subr.mxu0 0.0
    %354 = vmatpush1.msra.mxu0 0.0
    %355 = vmatprep.subr.mxu0 0.0
    %356 = vmatpush1.msra.mxu0 0.0
    %357 = vmatprep.subr.mxu0 0.0
    %358 = vmatpush1.msra.mxu0 0.0
    %359 = vmatprep.subr.mxu0 0.0
    %360 = vmatpush1.msra.mxu0 0.0
    %361 = vmatprep.subr.mxu0 0.0
    %362 = vmatpush1.msra.mxu0 0.0
    %363 = vmatprep.subr.mxu0 0.0
    %364 = vmatpush1.msra.mxu0 0.0
    %365 = vmatprep.subr.mxu0 0.0
    %366 = vmatpush1.msra.mxu0 0.0
    %367 = vmatprep.subr.mxu0 0.0
    %368 = vmatpush1.msra.mxu0 0.0
    %369 = vmatprep.subr.mxu0 0.0
    %370 = vmatpush1.msra.mxu0 0.0
    %371 = vmatprep.subr.mxu0 0.0
    %372 = vmatpush1.msra.mxu0 0.0
    %373 = vmatprep.subr.mxu0 0.0
    %374 = vmatpush1.msra.mxu0 0.0
    %375 = vmatprep.subr.mxu0 0.0
    %376 = vmatpush1.msra.mxu0 0.0
    %377 = vmatprep.subr.mxu0 0.0
    %378 = vmatpush1.msra.mxu0 0.0
    %379 = vmatprep.subr.mxu0 0.0
    %380 = vmatpush1.msra.mxu0 0.0
    %381 = vmatprep.subr.mxu0 0.0
    %382 = vmatpush1.msra.mxu0 0.0
    %383 = vmatprep.subr.mxu0 0.0
    %384 = vmatpush1.msra.mxu0 0.0
    %385 = vmatprep.subr.mxu0 0.0
    %386 = vmatpush1.msra.mxu0 0.0
    %387 = vmatprep.subr.mxu0 0.0
    %388 = vmatpush1.msra.mxu0 0.0
    %389 = vmatprep.subr.mxu0 0.0
    %390 = vmatpush1.msra.mxu0 0.0
    %391 = vmatprep.subr.mxu0 0.0
    %392 = vmatpush1.msra.mxu0 0.0
    %393 = vmatprep.subr.mxu0 0.0
    %394 = vmatpush1.msra.mxu0 0.0
    %395 = vmatprep.subr.mxu0 0.0
    %396 = vmatpush1.msra.mxu0 0.0
    %397 = vmatprep.subr.mxu0 0.0
    %398 = vmatpush1.msra.mxu0 0.0
    %399 = vmatprep.subr.mxu0 0.0
    %400 = vmatpush1.msra.mxu0 0.0
    %401 = vmatprep.subr.mxu0 0.0
    %402 = vmatpush1.msra.mxu0 0.0
    %403 = vmatprep.subr.mxu0 0.0
    %404 = vmatpush1.msra.mxu0 0.0
    %405 = vmatprep.subr.mxu0 0.0
    %406 = vmatpush1.msra.mxu0 0.0
    %407 = vmatprep.subr.mxu0 0.0
    %408 = vmatpush1.msra.mxu0 0.0
    %409 = vmatprep.subr.mxu0 0.0
    %410 = vmatpush1.msra.mxu0 0.0
    %411 = vmatprep.subr.mxu0 0.0
    %412 = vmatpush1.msra.mxu0 0.0
    %413 = vmatprep.subr.mxu0 0.0
    %414 = vmatpush1.msra.mxu0 0.0
    %415 = vmatprep.mubr.f32.mxu0 0.0
    %416 = vmatmul.mubr.f32.gmra.mrb[0].mxu0 %v342
    %v417 = vpop.f32.mrb[0].mxu0
    %v418 = vadd.f32 %v338, %v417
    %v419 = vpop.f32.mrb[0].mxu0
    %420 = vmatprep.mubr.f32.mxu0 0.0
    %421 = vmatmul.mubr.f32.gmra.mrb[0].mxu0 %v345
    %v422 = vpop.f32.mrb[0].mxu0
    %v423 = vadd.f32 %v338, %v422
    %v424 = vpop.f32.mrb[0].mxu0
    %425 = vdwg.mxu0
    %v426 = vmul.f32 %v418, 0.01
    %v427 = vmul.f32 %v423, 0.01
    %v428 = vmax.f32 %v418, %v426
    %v429 = vmax.f32 %v423, %v427
    %v430 = vld [vmem:[%s9] sm:$0xff]
    %v431 = vld [vmem:[%s10] sm:$0x1]
    %v433 = vlaneseq
    %v434 = vshrl.u32 %v433, 7
    %v435 = vsub.s32 0, %v434
    %v436 = vrot.slane %v431, %v435
    %v439 = vsel %vm250, %v428, 0
    %v442 = vsel %vm250, %v429, 0
    %444 = vmatprep.subr.mxu0 0.0
    %445 = vmatpush1.msra.mxu0 %v430
    %446 = vmatprep.subr.mxu0 0.0
    %447 = vmatpush1.msra.mxu0 0.0
    %448 = vmatprep.subr.mxu0 0.0
    %449 = vmatpush1.msra.mxu0 0.0
    %450 = vmatprep.subr.mxu0 0.0
    %451 = vmatpush1.msra.mxu0 0.0
    %452 = vmatprep.subr.mxu0 0.0
    %453 = vmatpush1.msra.mxu0 0.0
    %454 = vmatprep.subr.mxu0 0.0
    %455 = vmatpush1.msra.mxu0 0.0
    %456 = vmatprep.subr.mxu0 0.0
    %457 = vmatpush1.msra.mxu0 0.0
    %458 = vmatprep.subr.mxu0 0.0
    %459 = vmatpush1.msra.mxu0 0.0
    %460 = vmatprep.subr.mxu0 0.0
    %461 = vmatpush1.msra.mxu0 0.0
    %462 = vmatprep.subr.mxu0 0.0
    %463 = vmatpush1.msra.mxu0 0.0
    %464 = vmatprep.subr.mxu0 0.0
    %465 = vmatpush1.msra.mxu0 0.0
    %466 = vmatprep.subr.mxu0 0.0
    %467 = vmatpush1.msra.mxu0 0.0
    %468 = vmatprep.subr.mxu0 0.0
    %469 = vmatpush1.msra.mxu0 0.0
    %470 = vmatprep.subr.mxu0 0.0
    %471 = vmatpush1.msra.mxu0 0.0
    %472 = vmatprep.subr.mxu0 0.0
    %473 = vmatpush1.msra.mxu0 0.0
    %474 = vmatprep.subr.mxu0 0.0
    %475 = vmatpush1.msra.mxu0 0.0
    %476 = vmatprep.subr.mxu0 0.0
    %477 = vmatpush1.msra.mxu0 0.0
    %478 = vmatprep.subr.mxu0 0.0
    %479 = vmatpush1.msra.mxu0 0.0
    %480 = vmatprep.subr.mxu0 0.0
    %481 = vmatpush1.msra.mxu0 0.0
    %482 = vmatprep.subr.mxu0 0.0
    %483 = vmatpush1.msra.mxu0 0.0
    %484 = vmatprep.subr.mxu0 0.0
    %485 = vmatpush1.msra.mxu0 0.0
    %486 = vmatprep.subr.mxu0 0.0
    %487 = vmatpush1.msra.mxu0 0.0
    %488 = vmatprep.subr.mxu0 0.0
    %489 = vmatpush1.msra.mxu0 0.0
    %490 = vmatprep.subr.mxu0 0.0
    %491 = vmatpush1.msra.mxu0 0.0
    %492 = vmatprep.subr.mxu0 0.0
    %493 = vmatpush1.msra.mxu0 0.0
    %494 = vmatprep.subr.mxu0 0.0
    %495 = vmatpush1.msra.mxu0 0.0
    %496 = vmatprep.subr.mxu0 0.0
    %497 = vmatpush1.msra.mxu0 0.0
    %498 = vmatprep.subr.mxu0 0.0
    %499 = vmatpush1.msra.mxu0 0.0
    %500 = vmatprep.subr.mxu0 0.0
    %501 = vmatpush1.msra.mxu0 0.0
    %502 = vmatprep.subr.mxu0 0.0
    %503 = vmatpush1.msra.mxu0 0.0
    %504 = vmatprep.subr.mxu0 0.0
    %505 = vmatpush1.msra.mxu0 0.0
    %506 = vmatprep.subr.mxu0 0.0
    %507 = vmatpush1.msra.mxu0 0.0
    %508 = vmatprep.mubr.f32.mxu0 0.0
    %509 = vmatmul.mubr.f32.gmra.mrb[0].mxu0 %v439
    %v510 = vpop.f32.mrb[0].mxu0
    %v511 = vadd.f32 %v436, %v510
    %v512 = vpop.f32.mrb[0].mxu0
    %513 = vmatprep.mubr.f32.mxu0 0.0
    %514 = vmatmul.mubr.f32.gmra.mrb[0].mxu0 %v442
    %v515 = vpop.f32.mrb[0].mxu0
    %v516 = vadd.f32 %v436, %v515
    %v517 = vpop.f32.mrb[0].mxu0
    %518 = vdwg.mxu0
    %v519 = vmul.f32 %v511, 0.01
    %v520 = vmul.f32 %v516, 0.01
    %v521 = vmax.f32 %v511, %v519
    %v522 = vmax.f32 %v516, %v520
    %v523 = vld [vmem:[%s11] sm:$0xff]
    %v524 = vld [vmem:[%s11 + $0x8] sm:$0xff]
    %v525 = vld [vmem:[%s12] sm:$0x1]
    %v527 = vlaneseq
    %v528 = vshrl.u32 %v527, 7
    %v529 = vsub.s32 0, %v528
    %v530 = vrot.slane %v525, %v529
    %v533 = vsel %vm156, %v521, 0
    %v536 = vsel %vm156, %v522, 0
    %538 = vmatprep.subr.mxu0 0.0
    %539 = vmatpush1.msra.mxu0 %v523
    %540 = vmatprep.subr.mxu0 0.0
    %541 = vmatpush1.msra.mxu0 %v524
    %542 = vmatprep.subr.mxu0 0.0
    %543 = vmatpush1.msra.mxu0 0.0
    %544 = vmatprep.subr.mxu0 0.0
    %545 = vmatpush1.msra.mxu0 0.0
    %546 = vmatprep.subr.mxu0 0.0
    %547 = vmatpush1.msra.mxu0 0.0
    %548 = vmatprep.subr.mxu0 0.0
    %549 = vmatpush1.msra.mxu0 0.0
    %550 = vmatprep.subr.mxu0 0.0
    %551 = vmatpush1.msra.mxu0 0.0
    %552 = vmatprep.subr.mxu0 0.0
    %553 = vmatpush1.msra.mxu0 0.0
    %554 = vmatprep.subr.mxu0 0.0
    %555 = vmatpush1.msra.mxu0 0.0
    %556 = vmatprep.subr.mxu0 0.0
    %557 = vmatpush1.msra.mxu0 0.0
    %558 = vmatprep.subr.mxu0 0.0
    %559 = vmatpush1.msra.mxu0 0.0
    %560 = vmatprep.subr.mxu0 0.0
    %561 = vmatpush1.msra.mxu0 0.0
    %562 = vmatprep.subr.mxu0 0.0
    %563 = vmatpush1.msra.mxu0 0.0
    %564 = vmatprep.subr.mxu0 0.0
    %565 = vmatpush1.msra.mxu0 0.0
    %566 = vmatprep.subr.mxu0 0.0
    %567 = vmatpush1.msra.mxu0 0.0
    %568 = vmatprep.subr.mxu0 0.0
    %569 = vmatpush1.msra.mxu0 0.0
    %570 = vmatprep.subr.mxu0 0.0
    %571 = vmatpush1.msra.mxu0 0.0
    %572 = vmatprep.subr.mxu0 0.0
    %573 = vmatpush1.msra.mxu0 0.0
    %574 = vmatprep.subr.mxu0 0.0
    %575 = vmatpush1.msra.mxu0 0.0
    %576 = vmatprep.subr.mxu0 0.0
    %577 = vmatpush1.msra.mxu0 0.0
    %578 = vmatprep.subr.mxu0 0.0
    %579 = vmatpush1.msra.mxu0 0.0
    %580 = vmatprep.subr.mxu0 0.0
    %581 = vmatpush1.msra.mxu0 0.0
    %582 = vmatprep.subr.mxu0 0.0
    %583 = vmatpush1.msra.mxu0 0.0
    %584 = vmatprep.subr.mxu0 0.0
    %585 = vmatpush1.msra.mxu0 0.0
    %586 = vmatprep.subr.mxu0 0.0
    %587 = vmatpush1.msra.mxu0 0.0
    %588 = vmatprep.subr.mxu0 0.0
    %589 = vmatpush1.msra.mxu0 0.0
    %590 = vmatprep.subr.mxu0 0.0
    %591 = vmatpush1.msra.mxu0 0.0
    %592 = vmatprep.subr.mxu0 0.0
    %593 = vmatpush1.msra.mxu0 0.0
    %594 = vmatprep.subr.mxu0 0.0
    %595 = vmatpush1.msra.mxu0 0.0
    %596 = vmatprep.subr.mxu0 0.0
    %597 = vmatpush1.msra.mxu0 0.0
    %598 = vmatprep.subr.mxu0 0.0
    %599 = vmatpush1.msra.mxu0 0.0
    %600 = vmatprep.subr.mxu0 0.0
    %601 = vmatpush1.msra.mxu0 0.0
    %602 = vmatprep.mubr.f32.mxu0 0.0
    %603 = vmatmul.mubr.f32.gmra.mrb[0].mxu0 %v533
    %v604 = vpop.f32.mrb[0].mxu0
    %v605 = vadd.f32 %v530, %v604
    %v606 = vpop.f32.mrb[0].mxu0
    %607 = vmatprep.mubr.f32.mxu0 0.0
    %608 = vmatmul.mubr.f32.gmra.mrb[0].mxu0 %v536
    %v609 = vpop.f32.mrb[0].mxu0
    %v610 = vadd.f32 %v530, %v609
    %v611 = vpop.f32.mrb[0].mxu0
    %612 = vdwg.mxu0
    %v613 = vsub.f32 %v605, %v48
    %v614 = vsub.f32 %v610, %v49
    %v615 = vmul.f32 %v613, %v613
    %v616 = vmul.f32 %v614, %v614
    %v617 = vsel %vm61, %v615, 0.0
    %v618 = vsel %vm61, %v616, 0.0
    %v619 = vadd.f32 %v617, %v618
    %620 = vadd.xlane.f32.xlu0 %v619
    %v621 = vpop.xlane.xlu0 %620
    %v622 = vrot.slane %v621, 4
    %v623 = vadd.f32 %v621, %v622
    %v624 = vrot.slane %v623, 2
    %v625 = vadd.f32 %v623, %v624
    %v626 = vrot.slane %v625, 1
    %v627 = vadd.f32 %v625, %v626
    %s628 = vtos %v627
    %s629 = scalar_lea.smem [#allocation5], 0
    %630 = sst [smem:[%s629]] %s628
    %631 = vst.msk [vmem:[#allocation2] sm:$0xff] %vm61, %v48
    %632 = vst.msk [vmem:[#allocation2 + $0x8] sm:$0xff] %vm61, %v49
    %633 = vrot.lane.b32.xlu0 %v324, 32
    %v634 = vpop.permute.xlu0 %633
    %635 = vrot.lane.b32.xlu0 %v329, 32
    %v636 = vpop.permute.xlu0 %635
    %vm639 = vcmask 294144
    %640 = vst.msk [vmem:[#allocation2] sm:$0xff] %vm639, %v634
    %641 = vst.msk [vmem:[#allocation2 + $0x8] sm:$0xff] %vm639, %v636
    // Predicated region
    $region54: #{fe_model_forward.1} parent=1 // pred_check
      _
    $region55: #{fe_model_forward.1} parent=1 // pred_check_branch
      %643 = sbr.rel (0) target = $region57
    $region56: #{fe_model_forward.1} parent=1 // pred_region
      %s645 = ssub.s32 256, 256
      %646 = vsyncadd [#allocation3], %s645
      %s647 = sshll.u32 [#allocation2], 4
      %s648 = int_to_ptr.vmem [resolvable:$true] %s647
      %653 = dma.vmem_to_hbm [thread:$0]  %s648, 256, %s13, [#allocation3], 128, 128, 8
    $region57: #{fe_model_forward.1} parent=1 // pred_fallthru
      _
    // Predicated region
    $region58: #{fe_model_forward.1} parent=1 // pred_check
      _
    $region59: #{fe_model_forward.1} parent=1 // pred_check_branch
      %655 = sbr.rel (0) target = $region61
    $region60: #{fe_model_forward.1} parent=1 // pred_region
      %s657 = ssub.s32 16, 16
      %658 = vsyncadd [#allocation4], %s657
      %661 = dma.smem_to_hbm [#allocation5], 16, %s14, [#allocation4]
    $region61: #{fe_model_forward.1} parent=1 // pred_fallthru
      _
    // Predicated region
    $region62: #{fe_model_forward.1} parent=1 // pred_check
      _
    $region63: #{fe_model_forward.1} parent=1 // pred_check_branch
      %663 = sbr.rel (0) target = $region65
    $region64: #{fe_model_forward.1} parent=1 // pred_region
      %664 = dma.done [#allocation3], 256
    $region65: #{fe_model_forward.1} parent=1 // pred_fallthru
      _
    // Predicated region
    $region66: #{fe_model_forward.1} parent=1 // pred_check
      _
    $region67: #{fe_model_forward.1} parent=1 // pred_check_branch
      %666 = sbr.rel (0) target = $region69
    $region68: #{fe_model_forward.1} parent=1 // pred_region
      %667 = dma.done [#allocation4], 16
    $region69: #{fe_model_forward.1} parent=1 // pred_fallthru
      _
    %668 = sfence
    %669 = vsyncpa [#allocation3], 1
    %670 = vsyncpa [#allocation4], 1

</llo_original>
